<compile_context>
chip_gen: v7x
topology: tpu7x:2x2x1
jax: 0.10.0
libtpu: 0.0.40
codegen_flags: <defaults>
</compile_context>

<pallas_src>
import jax
import jax.numpy as jnp
from jax.experimental import pallas as pl
from jax.experimental.pallas import tpu as pltpu


LANES = 128  # lane-dense output slab width: col 0 = V, cols 1..num_actions = advantage


def _round_up(x, m):
    return ((x + m - 1) // m) * m


def dueling_head_kernel(x_ref, w_emb_ref, b_emb_ref, w_va_ref, b_va_ref,
                        va_ref, acc_ref):
    """Grid = (batch tiles, K tiles); K is the last ("arbitrary") axis."""
    k = pl.program_id(1)

    @pl.when(k == 0)
    def _init():
        # Fold the embedding bias into the accumulator init (ReLU comes after the
        # full reduction, so this is exactly Linear(x) + b_emb).
        acc_ref[...] = jnp.broadcast_to(b_emb_ref[...], acc_ref.shape)

    # Streaming K-tiled embedding matmul: bf16 operands, f32 MXU accumulation.
    acc_ref[...] += jnp.dot(x_ref[...], w_emb_ref[...],
                            preferred_element_type=jnp.float32)

    @pl.when(k == pl.num_programs(1) - 1)
    def _finalize():
        emb = jnp.maximum(acc_ref[...], 0.0)                      # ReLU in f32 (VPU)
        # Fused V/A head: one lane-dense (E, 128) matmul instead of (E,1) + (E,A).
        va = jnp.dot(emb.astype(w_va_ref.dtype), w_va_ref[...],
                     preferred_element_type=jnp.float32)
        va_ref[...] = (va + b_va_ref[...]).astype(va_ref.dtype)


def dueling_forward(states, params, hidden_states=None, *,
                    bm=256, bk=2048, compute_dtype=jnp.bfloat16):
    """DuelingNetwork.forward: states (B, H, W, C) -> (Q (B, num_actions), hidden)."""
    w_emb, b_emb, w_v, b_v, w_a, b_a = params
    d_model, embed_dim = w_emb.shape
    num_actions = w_a.shape[1]

    batch = states.shape[0]
    x = states.reshape(batch, -1)
    assert x.shape[1] == d_model

    # --- tile sizes (clamped for small problems; keep (8, 128) alignment) ---
    bm = min(bm, _round_up(batch, 8))
    bk = min(bk, _round_up(d_model, LANES))
    b_pad = _round_up(batch, bm)
    d_pad = _round_up(d_model, bk)

    # --- fused, lane-dense head weight: col 0 = V, cols 1..A = advantage ---
    w_va = jnp.zeros((embed_dim, LANES), compute_dtype)
    w_va = w_va.at[:, 0:1].set(w_v.astype(compute_dtype))
    w_va = w_va.at[:, 1:1 + num_actions].set(w_a.astype(compute_dtype))
    b_va = jnp.zeros((1, LANES), jnp.float32)
    b_va = b_va.at[:, 0:1].set(b_v.reshape(1, 1).astype(jnp.float32))
    b_va = b_va.at[:, 1:1 + num_actions].set(
        b_a.reshape(1, num_actions).astype(jnp.float32))

    # --- bf16 streaming operands, zero-padded to the tile grid (zeros are inert) ---
    x_p = jnp.zeros((b_pad, d_pad), compute_dtype).at[:batch, :d_model].set(
        x.astype(compute_dtype))
    w_emb_p = jnp.zeros((d_pad, embed_dim), compute_dtype).at[:d_model, :].set(
        w_emb.astype(compute_dtype))
    b_emb_p = b_emb.reshape(1, embed_dim).astype(jnp.float32)

    grid = (b_pad // bm, d_pad // bk)

    # --- explicit VMEM budget: double-buffered streaming tiles + invariants + acc ---
    isz = jnp.dtype(compute_dtype).itemsize
    vmem_est = (2 * bm * bk * isz                 # x tile (double-buffered)
                + 2 * bk * embed_dim * isz        # w_emb tile (double-buffered)
                + 2 * embed_dim * LANES * isz     # fused head weight
                + 2 * (embed_dim + LANES) * 4     # biases
                + bm * embed_dim * 4              # f32 accumulator scratch
                + 2 * bm * LANES * 4)             # output tile (double-buffered)
    vmem_limit = int(min(max(int(1.5 * vmem_est) + (4 << 20), 16 << 20), 100 << 20))

    va = pl.pallas_call(
        dueling_head_kernel,
        out_shape=jax.ShapeDtypeStruct((b_pad, LANES), jnp.float32),
        grid=grid,
        in_specs=[
            pl.BlockSpec((bm, bk), lambda i, k: (i, k)),            # x tile
            pl.BlockSpec((bk, embed_dim), lambda i, k: (k, 0)),     # w_emb tile
            pl.BlockSpec((1, embed_dim), lambda i, k: (0, 0)),      # b_emb (invariant)
            pl.BlockSpec((embed_dim, LANES), lambda i, k: (0, 0)),  # fused V|A weight
            pl.BlockSpec((1, LANES), lambda i, k: (0, 0)),          # fused V|A bias
        ],
        out_specs=pl.BlockSpec((bm, LANES), lambda i, k: (i, 0)),
        scratch_shapes=[pltpu.VMEM((bm, embed_dim), jnp.float32)],
        compiler_params=pltpu.CompilerParams(
            dimension_semantics=("parallel", "arbitrary"),
            vmem_limit_bytes=vmem_limit),
    )(x_p, w_emb_p, b_emb_p, w_va, b_va)

    # Dueling combine (O(B*A), done in XLA): torch.mean(advantage) is a GLOBAL mean
    # over batch AND actions, so it is computed here from the full advantage slab —
    # keeping batch tiles independent inside the kernel (enables "parallel" batch axis).
    va = va[:batch]
    v = va[:, 0:1]
    adv = va[:, 1:1 + num_actions]
    q = v + adv - jnp.mean(adv)
    return q, hidden_states


def init_params(key, in_dim, embed_dim, num_actions):
    """Deterministic synthetic parameters (weights stored as (in, out))."""
    k1, k2, k3 = jax.random.split(key, 3)
    w_emb = jax.random.normal(k1, (in_dim, embed_dim), jnp.float32) * 0.02
    b_emb = jnp.zeros((1, embed_dim), jnp.float32)
    w_v = jax.random.normal(k2, (embed_dim, 1), jnp.float32) * 0.1
    b_v = jnp.zeros((1, 1), jnp.float32)
    w_a = jax.random.normal(k3, (embed_dim, num_actions), jnp.float32) * 0.1
    b_a = jnp.zeros((1, num_actions), jnp.float32)
    return (w_emb, b_emb, w_v, b_v, w_a, b_a)


if __name__ == "__main__":
    # Small shapes consistent with the module's forward:
    # states: (batch, H, W, C) = (2, 16, 16, 4), embed_dim = 32, num_actions = 6.
    # NOTE: at these toy sizes the kernel is pure fixed overhead; the tiling/defaults
    # (bm=256, bk=2048, bf16 streaming) are chosen for Atari-scale D=84*84*4, B>=128.
    B, H, W, C = 2, 16, 16, 4
    EMBED_DIM = 32
    NUM_ACTIONS = 6

    key = jax.random.PRNGKey(0)
    k_x, k_p = jax.random.split(key)
    states = jax.random.normal(k_x, (B, H, W, C), jnp.float32)
    params = init_params(k_p, H * W * C, EMBED_DIM, NUM_ACTIONS)

    q_values, hidden = dueling_forward(states, params)
    q_values = jax.block_until_ready(q_values)

    # Reference with the same bf16 input/weight rounding (f32 accumulation).
    x = states.reshape(B, -1)
    w_emb, b_emb, w_v, b_v, w_a, b_a = params
    bf = lambda a: a.astype(jnp.bfloat16)
    emb_ref = jnp.maximum(
        jnp.dot(bf(x), bf(w_emb), preferred_element_type=jnp.float32) + b_emb, 0.0)
    v_ref = jnp.dot(bf(emb_ref), bf(w_v), preferred_element_type=jnp.float32) + b_v
    a_ref = jnp.dot(bf(emb_ref), bf(w_a), preferred_element_type=jnp.float32) + b_a
    q_ref = v_ref + a_ref - jnp.mean(a_ref)

    assert q_values.shape == (B, NUM_ACTIONS)
    assert hidden is None
    max_err = float(jnp.max(jnp.abs(q_values - q_ref)))
    assert jnp.allclose(q_values, q_ref, atol=1e-2, rtol=1e-2), max_err

    print("KERNEL_OK")
</pallas_src>

<mosaic_0001>
module attributes {stable_mosaic.version = 11 : i64} {
  func.func @dueling_head_kernel(%arg0: i32, %arg1: i32, %arg2: memref<8x1024xbf16, #tpu.memory_space<vmem>>, %arg3: memref<1024x32xbf16, #tpu.memory_space<vmem>>, %arg4: memref<1x32xf32, #tpu.memory_space<vmem>>, %arg5: memref<32x128xbf16, #tpu.memory_space<vmem>>, %arg6: memref<1x128xf32, #tpu.memory_space<vmem>>, %arg7: memref<8x128xf32, #tpu.memory_space<vmem>>, %arg8: memref<8x32xf32, #tpu.memory_space<vmem>>) attributes {dimension_semantics = [#tpu.dimension_semantics<parallel>, #tpu.dimension_semantics<arbitrary>], iteration_bounds = array<i64: 1, 1>, scalar_prefetch = 0 : i64, scratch_operands = 1 : i64, tpu.core_type = #tpu.core_type<tc>, window_params = [{transform_indices = @transform_0, window_bounds = array<i64: 8, 1024>}, {transform_indices = @transform_1, window_bounds = array<i64: 1024, 32>}, {pipeline_mode = #tpu.pipeline_mode<synchronous>, transform_indices = @transform_2, window_bounds = array<i64: 1, 32>}, {pipeline_mode = #tpu.pipeline_mode<synchronous>, transform_indices = @transform_3, window_bounds = array<i64: 32, 128>}, {pipeline_mode = #tpu.pipeline_mode<synchronous>, transform_indices = @transform_4, window_bounds = array<i64: 1, 128>}, {transform_indices = @transform_5, window_bounds = array<i64: 8, 128>}]} {
    %c0_i32 = arith.constant 0 : i32
    %0 = arith.cmpi eq, %arg1, %c0_i32 : i32
    %1 = arith.extui %0 : i1 to i32
    %c0_i32_0 = arith.constant 0 : i32
    %2 = arith.cmpi ne, %1, %c0_i32_0 : i32
    scf.if %2 {
      %c0_10 = arith.constant 0 : index
      %c0_11 = arith.constant 0 : index
      %12 = vector.load %arg4[%c0_10, %c0_11] : memref<1x32xf32, #tpu.memory_space<vmem>>, vector<1x32xf32>
      %13 = vector.shape_cast %12 : vector<1x32xf32> to vector<1x32xf32>
      %14 = vector.broadcast %13 : vector<1x32xf32> to vector<8x32xf32>
      %c0_12 = arith.constant 0 : index
      %c0_13 = arith.constant 0 : index
      %15 = vector.load %arg8[%c0_12, %c0_13] : memref<8x32xf32, #tpu.memory_space<vmem>>, vector<8x32xf32>
      tpu.vector_store %arg8[%c0_12, %c0_13], %14 {strides = array<i32>} : memref<8x32xf32, #tpu.memory_space<vmem>>, vector<8x32xf32>,
    } else {
    }
    %c0 = arith.constant 0 : index
    %c0_1 = arith.constant 0 : index
    %3 = vector.load %arg8[%c0, %c0_1] : memref<8x32xf32, #tpu.memory_space<vmem>>, vector<8x32xf32>
    %c0_2 = arith.constant 0 : index
    %c0_3 = arith.constant 0 : index
    %4 = vector.load %arg2[%c0_2, %c0_3] : memref<8x1024xbf16, #tpu.memory_space<vmem>>, vector<8x1024xbf16>
    %c0_4 = arith.constant 0 : index
    %c0_5 = arith.constant 0 : index
    %5 = vector.load %arg3[%c0_4, %c0_5] : memref<1024x32xbf16, #tpu.memory_space<vmem>>, vector<1024x32xbf16>
    %cst = arith.constant dense<0.000000e+00> : vector<8x32xf32>
    %6 = tpu.matmul %4, %5, %cst {dimension_numbers = #tpu.dot_dimension_numbers<[1], [0], [0], [1], [0, 0, 1, 1], [], []>} : vector<8x1024xbf16>, vector<1024x32xbf16>, vector<8x32xf32> -> vector<8x32xf32>
    %7 = arith.addf %3, %6 : vector<8x32xf32>
    %c0_6 = arith.constant 0 : index
    %c0_7 = arith.constant 0 : index
    %8 = vector.load %arg8[%c0_6, %c0_7] : memref<8x32xf32, #tpu.memory_space<vmem>>, vector<8x32xf32>
    tpu.vector_store %arg8[%c0_6, %c0_7], %7 {strides = array<i32>} : memref<8x32xf32, #tpu.memory_space<vmem>>, vector<8x32xf32>,
    %c0_i32_8 = arith.constant 0 : i32
    %9 = arith.cmpi eq, %arg1, %c0_i32_8 : i32
    %10 = arith.extui %9 : i1 to i32
    %c0_i32_9 = arith.constant 0 : i32
    %11 = arith.cmpi ne, %10, %c0_i32_9 : i32
    scf.if %11 {
      %c0_10 = arith.constant 0 : index
      %c0_11 = arith.constant 0 : index
      %12 = vector.load %arg8[%c0_10, %c0_11] : memref<8x32xf32, #tpu.memory_space<vmem>>, vector<8x32xf32>
      %cst_12 = arith.constant 0.000000e+00 : f32
      %13 = vector.broadcast %cst_12 : f32 to vector<8x32xf32>
      %14 = arith.maximumf %12, %13 : vector<8x32xf32>
      %15 = arith.truncf %14 : vector<8x32xf32> to vector<8x32xbf16>
      %c0_13 = arith.constant 0 : index
      %c0_14 = arith.constant 0 : index
      %16 = vector.load %arg5[%c0_13, %c0_14] : memref<32x128xbf16, #tpu.memory_space<vmem>>, vector<32x128xbf16>
      %cst_15 = arith.constant dense<0.000000e+00> : vector<8x128xf32>
      %17 = tpu.matmul %15, %16, %cst_15 {dimension_numbers = #tpu.dot_dimension_numbers<[1], [0], [0], [1], [0, 0, 1, 1], [], []>} : vector<8x32xbf16>, vector<32x128xbf16>, vector<8x128xf32> -> vector<8x128xf32>
      %c0_16 = arith.constant 0 : index
      %c0_17 = arith.constant 0 : index
      %18 = vector.load %arg6[%c0_16, %c0_17] : memref<1x128xf32, #tpu.memory_space<vmem>>, vector<1x128xf32>
      %19 = vector.broadcast %18 : vector<1x128xf32> to vector<8x128xf32>
      %20 = arith.addf %17, %19 : vector<8x128xf32>
      %c0_18 = arith.constant 0 : index
      %c0_19 = arith.constant 0 : index
      %21 = vector.load %arg7[%c0_18, %c0_19] : memref<8x128xf32, #tpu.memory_space<vmem>>, vector<8x128xf32>
      tpu.vector_store %arg7[%c0_18, %c0_19], %20 {strides = array<i32>} : memref<8x128xf32, #tpu.memory_space<vmem>>, vector<8x128xf32>,
    } else {
    }
    return
  }
  func.func @transform_0(%arg0: i32, %arg1: i32) -> (i32, i32) {
    %c0_i32 = arith.constant 0 : i32
    return %arg0, %arg1 : i32, i32
  }
  func.func @transform_1(%arg0: i32, %arg1: i32) -> (i32, i32) {
    %c0_i32 = arith.constant 0 : i32
    %c0_i32_0 = arith.constant 0 : i32
    return %arg1, %c0_i32 : i32, i32
  }
  func.func @transform_2(%arg0: i32, %arg1: i32) -> (i32, i32) {
    %c0_i32 = arith.constant 0 : i32
    %c0_i32_0 = arith.constant 0 : i32
    %c0_i32_1 = arith.constant 0 : i32
    return %c0_i32, %c0_i32_0 : i32, i32
  }
  func.func @transform_3(%arg0: i32, %arg1: i32) -> (i32, i32) {
    %c0_i32 = arith.constant 0 : i32
    %c0_i32_0 = arith.constant 0 : i32
    %c0_i32_1 = arith.constant 0 : i32
    return %c0_i32, %c0_i32_0 : i32, i32
  }
  func.func @transform_4(%arg0: i32, %arg1: i32) -> (i32, i32) {
    %c0_i32 = arith.constant 0 : i32
    %c0_i32_0 = arith.constant 0 : i32
    %c0_i32_1 = arith.constant 0 : i32
    return %c0_i32, %c0_i32_0 : i32, i32
  }
  func.func @transform_5(%arg0: i32, %arg1: i32) -> (i32, i32) {
    %c0_i32 = arith.constant 0 : i32
    %c0_i32_0 = arith.constant 0 : i32
    return %arg0, %c0_i32 : i32, i32
  }
}

</mosaic_0001>

<llo_original>
// kernel: tpu_custom_call.1
$region0: #{tpu_custom_call.1}
  #allocation0 [shape = 'u32[]', space=smem, size = 0x4, offset = 0x4, fixed_abs, tag = 'smem constant byte address 0x4 - core index']
  #allocation1 [shape = 'u32[144,128]{1,0:T(1,128)}', space=vmem, size = 0x12000, scoped, tag = 'internal scratch']
  #allocation2 [shape = 'f32[8,32]{1,0:T(8,128)}', space=vmem, size = 0x1000, scoped, tag = 'scratch operand']
  %s0 = inlined_call_operand.vmem [shape: bf16[8,1024], index: 0, kind: input, shape index: {}]
  %s1 = inlined_call_operand.vmem [shape: bf16[1024,32], index: 1, kind: input, shape index: {}]
  %s2 = inlined_call_operand.vmem [shape: f32[1,32], index: 2, kind: input, shape index: {}]
  %s3 = inlined_call_operand.vmem [shape: bf16[32,128], index: 3, kind: input, shape index: {}]
  %s4 = inlined_call_operand.vmem [shape: f32[1,128], index: 4, kind: input, shape index: {}]
  %s5 = inlined_call_operand.hbm [shape: f32[8,128], index: 5, kind: output, shape index: {}]
  %s6 = sld [smem:[#allocation0]]
  $region38: #{tpu_custom_call.1} parent=0
    _
  %s8 = ssub.s32 1, %s6
  %s9 = scalar_select 0, %s8, %s6
  $region1: #{tpu_custom_call.1} parent=0
    #allocation3 [shape = 'u8[4096]{0}', space=vmem, size = 0x1000, scoped, tag = 'output window, operand 0, single buffered']
    #allocation4 [shape = 's32[1]{0}', space=sflag, size = 0x4, scoped, tag = 'scoped memory for tpu_custom_call.1']
    %10 = vsyncpa [#allocation4], 0
    // Predicated region
    $region2: #{tpu_custom_call.1} parent=1 // pred_check
      _
    $region3: #{tpu_custom_call.1} parent=1 // pred_check_branch
      %12 = sbr.rel (0) target = $region5
    $region4: #{tpu_custom_call.1} parent=1 // pred_region
      _
    $region5: #{tpu_custom_call.1} parent=1 // pred_fallthru
      _
    // Predicated region
    $region6: #{tpu_custom_call.1} parent=1 // pred_check
      _
    $region7: #{tpu_custom_call.1} parent=1 // pred_check_branch
      %14 = sbr.rel (0) target = $region9
    $region8: #{tpu_custom_call.1} parent=1 // pred_region
      _
    $region9: #{tpu_custom_call.1} parent=1 // pred_fallthru
      _
    // Predicated region
    $region10: #{tpu_custom_call.1} parent=1 // pred_check
      _
    $region11: #{tpu_custom_call.1} parent=1 // pred_check_branch
      %16 = sbr.rel (0) target = $region13
    $region12: #{tpu_custom_call.1} parent=1 // pred_region
      _
    $region13: #{tpu_custom_call.1} parent=1 // pred_fallthru
      _
    // Predicated region
    $region14: #{tpu_custom_call.1} parent=1 // pred_check
      _
    $region15: #{tpu_custom_call.1} parent=1 // pred_check_branch
      %18 = sbr.rel (0) target = $region17
    $region16: #{tpu_custom_call.1} parent=1 // pred_region
      _
    $region17: #{tpu_custom_call.1} parent=1 // pred_fallthru
      _
    // Predicated region
    $region18: #{tpu_custom_call.1} parent=1 // pred_check
      _
    $region19: #{tpu_custom_call.1} parent=1 // pred_check_branch
      %20 = sbr.rel (0) target = $region21
    $region20: #{tpu_custom_call.1} parent=1 // pred_region
      _
    $region21: #{tpu_custom_call.1} parent=1 // pred_fallthru
      _
    %p22 = scmp.eq.s32.totalorder 0, 0
    // Predicated region
    $region22: #{tpu_custom_call.1} parent=1 // pred_check
      %p23 = pneg %p22
    $region23: #{tpu_custom_call.1} parent=1 // pred_check_branch
      %25 = sbr.rel (%p23) target = $region25
    $region24: #{tpu_custom_call.1} parent=1 // pred_region
      %v26 = vld [vmem:[%s2] sm:$0x1]
      %v28 = vlaneseq
      %v29 = vshrl.u32 %v28, 7
      %v30 = vsub.s32 0, %v29
      %v31 = vrot.slane %v26, %v30
      %vm33 = vcmask 261120
      %34 = vst.msk [vmem:[#allocation2] sm:$0xff] %vm33, %v31
    $region25: #{tpu_custom_call.1} parent=1 // pred_fallthru
      _
    %v35 = vld [vmem:[#allocation2] sm:$0xff]
    %v36 = vld [vmem:[%s0] sm:$0xff]
    %v37 = vld [vmem:[%s0 + $0x8] sm:$0xff]
    %v38 = vld [vmem:[%s0 + $0x10] sm:$0xff]
    %v39 = vld [vmem:[%s0 + $0x18] sm:$0xff]
    %v40 = vld [vmem:[%s1] sm:$0xf]
    %v41 = vld [vmem:[%s1 + $0x4] sm:$0xf]
    %v42 = vld [vmem:[%s1 + $0x8] sm:$0xf]
    %v43 = vld [vmem:[%s1 + $0xc] sm:$0xf]
    %v44 = vld [vmem:[%s1 + $0x10] sm:$0xf]
    %v45 = vld [vmem:[%s1 + $0x14] sm:$0xf]
    %v46 = vld [vmem:[%s1 + $0x18] sm:$0xf]
    %v47 = vld [vmem:[%s1 + $0x1c] sm:$0xf]
    %v48 = vld [vmem:[%s1 + $0x20] sm:$0xf]
    %v49 = vld [vmem:[%s1 + $0x24] sm:$0xf]
    %v50 = vld [vmem:[%s1 + $0x28] sm:$0xf]
    %v51 = vld [vmem:[%s1 + $0x2c] sm:$0xf]
    %v52 = vld [vmem:[%s1 + $0x30] sm:$0xf]
    %v53 = vld [vmem:[%s1 + $0x34] sm:$0xf]
    %v54 = vld [vmem:[%s1 + $0x38] sm:$0xf]
    %v55 = vld [vmem:[%s1 + $0x3c] sm:$0xf]
    %v56 = vld [vmem:[%s1 + $0x40] sm:$0xf]
    %v57 = vld [vmem:[%s1 + $0x44] sm:$0xf]
    %v58 = vld [vmem:[%s1 + $0x48] sm:$0xf]
    %v59 = vld [vmem:[%s1 + $0x4c] sm:$0xf]
    %v60 = vld [vmem:[%s1 + $0x50] sm:$0xf]
    %v61 = vld [vmem:[%s1 + $0x54] sm:$0xf]
    %v62 = vld [vmem:[%s1 + $0x58] sm:$0xf]
    %v63 = vld [vmem:[%s1 + $0x5c] sm:$0xf]
    %v64 = vld [vmem:[%s1 + $0x60] sm:$0xf]
    %v65 = vld [vmem:[%s1 + $0x64] sm:$0xf]
    %v66 = vld [vmem:[%s1 + $0x68] sm:$0xf]
    %v67 = vld [vmem:[%s1 + $0x6c] sm:$0xf]
    %v68 = vld [vmem:[%s1 + $0x70] sm:$0xf]
    %v69 = vld [vmem:[%s1 + $0x74] sm:$0xf]
    %v70 = vld [vmem:[%s1 + $0x78] sm:$0xf]
    %v71 = vld [vmem:[%s1 + $0x7c] sm:$0xf]
    %v72 = vld [vmem:[%s1 + $0x80] sm:$0xf]
    %v73 = vld [vmem:[%s1 + $0x84] sm:$0xf]
    %v74 = vld [vmem:[%s1 + $0x88] sm:$0xf]
    %v75 = vld [vmem:[%s1 + $0x8c] sm:$0xf]
    %v76 = vld [vmem:[%s1 + $0x90] sm:$0xf]
    %v77 = vld [vmem:[%s1 + $0x94] sm:$0xf]
    %v78 = vld [vmem:[%s1 + $0x98] sm:$0xf]
    %v79 = vld [vmem:[%s1 + $0x9c] sm:$0xf]
    %v80 = vld [vmem:[%s1 + $0xa0] sm:$0xf]
    %v81 = vld [vmem:[%s1 + $0xa4] sm:$0xf]
    %v82 = vld [vmem:[%s1 + $0xa8] sm:$0xf]
    %v83 = vld [vmem:[%s1 + $0xac] sm:$0xf]
    %v84 = vld [vmem:[%s1 + $0xb0] sm:$0xf]
    %v85 = vld [vmem:[%s1 + $0xb4] sm:$0xf]
    %v86 = vld [vmem:[%s1 + $0xb8] sm:$0xf]
    %v87 = vld [vmem:[%s1 + $0xbc] sm:$0xf]
    %v88 = vld [vmem:[%s1 + $0xc0] sm:$0xf]
    %v89 = vld [vmem:[%s1 + $0xc4] sm:$0xf]
    %v90 = vld [vmem:[%s1 + $0xc8] sm:$0xf]
    %v91 = vld [vmem:[%s1 + $0xcc] sm:$0xf]
    %v92 = vld [vmem:[%s1 + $0xd0] sm:$0xf]
    %v93 = vld [vmem:[%s1 + $0xd4] sm:$0xf]
    %v94 = vld [vmem:[%s1 + $0xd8] sm:$0xf]
    %v95 = vld [vmem:[%s1 + $0xdc] sm:$0xf]
    %v96 = vld [vmem:[%s1 + $0xe0] sm:$0xf]
    %v97 = vld [vmem:[%s1 + $0xe4] sm:$0xf]
    %v98 = vld [vmem:[%s1 + $0xe8] sm:$0xf]
    %v99 = vld [vmem:[%s1 + $0xec] sm:$0xf]
    %v100 = vld [vmem:[%s1 + $0xf0] sm:$0xf]
    %v101 = vld [vmem:[%s1 + $0xf4] sm:$0xf]
    %v102 = vld [vmem:[%s1 + $0xf8] sm:$0xf]
    %v103 = vld [vmem:[%s1 + $0xfc] sm:$0xf]
    %v104 = vld [vmem:[%s1 + $0x100] sm:$0xf]
    %v105 = vld [vmem:[%s1 + $0x104] sm:$0xf]
    %v106 = vld [vmem:[%s1 + $0x108] sm:$0xf]
    %v107 = vld [vmem:[%s1 + $0x10c] sm:$0xf]
    %v108 = vld [vmem:[%s1 + $0x110] sm:$0xf]
    %v109 = vld [vmem:[%s1 + $0x114] sm:$0xf]
    %v110 = vld [vmem:[%s1 + $0x118] sm:$0xf]
    %v111 = vld [vmem:[%s1 + $0x11c] sm:$0xf]
    %v112 = vld [vmem:[%s1 + $0x120] sm:$0xf]
    %v113 = vld [vmem:[%s1 + $0x124] sm:$0xf]
    %v114 = vld [vmem:[%s1 + $0x128] sm:$0xf]
    %v115 = vld [vmem:[%s1 + $0x12c] sm:$0xf]
    %v116 = vld [vmem:[%s1 + $0x130] sm:$0xf]
    %v117 = vld [vmem:[%s1 + $0x134] sm:$0xf]
    %v118 = vld [vmem:[%s1 + $0x138] sm:$0xf]
    %v119 = vld [vmem:[%s1 + $0x13c] sm:$0xf]
    %v120 = vld [vmem:[%s1 + $0x140] sm:$0xf]
    %v121 = vld [vmem:[%s1 + $0x144] sm:$0xf]
    %v122 = vld [vmem:[%s1 + $0x148] sm:$0xf]
    %v123 = vld [vmem:[%s1 + $0x14c] sm:$0xf]
    %v124 = vld [vmem:[%s1 + $0x150] sm:$0xf]
    %v125 = vld [vmem:[%s1 + $0x154] sm:$0xf]
    %v126 = vld [vmem:[%s1 + $0x158] sm:$0xf]
    %v127 = vld [vmem:[%s1 + $0x15c] sm:$0xf]
    %v128 = vld [vmem:[%s1 + $0x160] sm:$0xf]
    %v129 = vld [vmem:[%s1 + $0x164] sm:$0xf]
    %v130 = vld [vmem:[%s1 + $0x168] sm:$0xf]
    %v131 = vld [vmem:[%s1 + $0x16c] sm:$0xf]
    %v132 = vld [vmem:[%s1 + $0x170] sm:$0xf]
    %v133 = vld [vmem:[%s1 + $0x174] sm:$0xf]
    %v134 = vld [vmem:[%s1 + $0x178] sm:$0xf]
    %v135 = vld [vmem:[%s1 + $0x17c] sm:$0xf]
    %v136 = vld [vmem:[%s1 + $0x180] sm:$0xf]
    %v137 = vld [vmem:[%s1 + $0x184] sm:$0xf]
    %v138 = vld [vmem:[%s1 + $0x188] sm:$0xf]
    %v139 = vld [vmem:[%s1 + $0x18c] sm:$0xf]
    %v140 = vld [vmem:[%s1 + $0x190] sm:$0xf]
    %v141 = vld [vmem:[%s1 + $0x194] sm:$0xf]
    %v142 = vld [vmem:[%s1 + $0x198] sm:$0xf]
    %v143 = vld [vmem:[%s1 + $0x19c] sm:$0xf]
    %v144 = vld [vmem:[%s1 + $0x1a0] sm:$0xf]
    %v145 = vld [vmem:[%s1 + $0x1a4] sm:$0xf]
    %v146 = vld [vmem:[%s1 + $0x1a8] sm:$0xf]
    %v147 = vld [vmem:[%s1 + $0x1ac] sm:$0xf]
    %v148 = vld [vmem:[%s1 + $0x1b0] sm:$0xf]
    %v149 = vld [vmem:[%s1 + $0x1b4] sm:$0xf]
    %v150 = vld [vmem:[%s1 + $0x1b8] sm:$0xf]
    %v151 = vld [vmem:[%s1 + $0x1bc] sm:$0xf]
    %v152 = vld [vmem:[%s1 + $0x1c0] sm:$0xf]
    %v153 = vld [vmem:[%s1 + $0x1c4] sm:$0xf]
    %v154 = vld [vmem:[%s1 + $0x1c8] sm:$0xf]
    %v155 = vld [vmem:[%s1 + $0x1cc] sm:$0xf]
    %v156 = vld [vmem:[%s1 + $0x1d0] sm:$0xf]
    %v157 = vld [vmem:[%s1 + $0x1d4] sm:$0xf]
    %v158 = vld [vmem:[%s1 + $0x1d8] sm:$0xf]
    %v159 = vld [vmem:[%s1 + $0x1dc] sm:$0xf]
    %v160 = vld [vmem:[%s1 + $0x1e0] sm:$0xf]
    %v161 = vld [vmem:[%s1 + $0x1e4] sm:$0xf]
    %v162 = vld [vmem:[%s1 + $0x1e8] sm:$0xf]
    %v163 = vld [vmem:[%s1 + $0x1ec] sm:$0xf]
    %v164 = vld [vmem:[%s1 + $0x1f0] sm:$0xf]
    %v165 = vld [vmem:[%s1 + $0x1f4] sm:$0xf]
    %v166 = vld [vmem:[%s1 + $0x1f8] sm:$0xf]
    %v167 = vld [vmem:[%s1 + $0x1fc] sm:$0xf]
    %v172 = vunpack.c.l.b16 %v36
    %v173 = vunpack.c.h.b16 %v36
    %v174 = vunpack.c.l.b16 %v37
    %v175 = vunpack.c.h.b16 %v37
    %v176 = vunpack.c.l.b16 %v38
    %v177 = vunpack.c.h.b16 %v38
    %v178 = vunpack.c.l.b16 %v39
    %v179 = vunpack.c.h.b16 %v39
    %v180 = vpack.c.b16 %v172, %v172
    %v181 = vpack.c.b16 %v173, %v173
    %v182 = vpack.c.b16 %v174, %v174
    %v183 = vpack.c.b16 %v175, %v175
    %v184 = vpack.c.b16 %v176, %v176
    %v185 = vpack.c.b16 %v177, %v177
    %v186 = vpack.c.b16 %v178, %v178
    %v187 = vpack.c.b16 %v179, %v179
    %v324 = vunpack.c.l.b16 %v40
    %v325 = vunpack.c.l.b16 %v41
    %v326 = vunpack.c.l.b16 %v42
    %v327 = vunpack.c.l.b16 %v43
    %v328 = vunpack.c.l.b16 %v44
    %v329 = vunpack.c.l.b16 %v45
    %v330 = vunpack.c.l.b16 %v46
    %v331 = vunpack.c.l.b16 %v47
    %v332 = vunpack.c.l.b16 %v48
    %v333 = vunpack.c.l.b16 %v49
    %v334 = vunpack.c.l.b16 %v50
    %v335 = vunpack.c.l.b16 %v51
    %v336 = vunpack.c.l.b16 %v52
    %v337 = vunpack.c.l.b16 %v53
    %v338 = vunpack.c.l.b16 %v54
    %v339 = vunpack.c.l.b16 %v55
    %v340 = vunpack.c.l.b16 %v56
    %v341 = vunpack.c.l.b16 %v57
    %v342 = vunpack.c.l.b16 %v58
    %v343 = vunpack.c.l.b16 %v59
    %v344 = vunpack.c.l.b16 %v60
    %v345 = vunpack.c.l.b16 %v61
    %v346 = vunpack.c.l.b16 %v62
    %v347 = vunpack.c.l.b16 %v63
    %v348 = vunpack.c.l.b16 %v64
    %v349 = vunpack.c.l.b16 %v65
    %v350 = vunpack.c.l.b16 %v66
    %v351 = vunpack.c.l.b16 %v67
    %v352 = vunpack.c.l.b16 %v68
    %v353 = vunpack.c.l.b16 %v69
    %v354 = vunpack.c.l.b16 %v70
    %v355 = vunpack.c.l.b16 %v71
    %v356 = vunpack.c.l.b16 %v72
    %v357 = vunpack.c.l.b16 %v73
    %v358 = vunpack.c.l.b16 %v74
    %v359 = vunpack.c.l.b16 %v75
    %v360 = vunpack.c.l.b16 %v76
    %v361 = vunpack.c.l.b16 %v77
    %v362 = vunpack.c.l.b16 %v78
    %v363 = vunpack.c.l.b16 %v79
    %v364 = vunpack.c.l.b16 %v80
    %v365 = vunpack.c.l.b16 %v81
    %v366 = vunpack.c.l.b16 %v82
    %v367 = vunpack.c.l.b16 %v83
    %v368 = vunpack.c.l.b16 %v84
    %v369 = vunpack.c.l.b16 %v85
    %v370 = vunpack.c.l.b16 %v86
    %v371 = vunpack.c.l.b16 %v87
    %v372 = vunpack.c.l.b16 %v88
    %v373 = vunpack.c.l.b16 %v89
    %v374 = vunpack.c.l.b16 %v90
    %v375 = vunpack.c.l.b16 %v91
    %v376 = vunpack.c.l.b16 %v92
    %v377 = vunpack.c.l.b16 %v93
    %v378 = vunpack.c.l.b16 %v94
    %v379 = vunpack.c.l.b16 %v95
    %v380 = vunpack.c.l.b16 %v96
    %v381 = vunpack.c.l.b16 %v97
    %v382 = vunpack.c.l.b16 %v98
    %v383 = vunpack.c.l.b16 %v99
    %v384 = vunpack.c.l.b16 %v100
    %v385 = vunpack.c.l.b16 %v101
    %v386 = vunpack.c.l.b16 %v102
    %v387 = vunpack.c.l.b16 %v103
    %v388 = vunpack.c.l.b16 %v104
    %v389 = vunpack.c.l.b16 %v105
    %v390 = vunpack.c.l.b16 %v106
    %v391 = vunpack.c.l.b16 %v107
    %v392 = vunpack.c.l.b16 %v108
    %v393 = vunpack.c.l.b16 %v109
    %v394 = vunpack.c.l.b16 %v110
    %v395 = vunpack.c.l.b16 %v111
    %v396 = vunpack.c.l.b16 %v112
    %v397 = vunpack.c.l.b16 %v113
    %v398 = vunpack.c.l.b16 %v114
    %v399 = vunpack.c.l.b16 %v115
    %v400 = vunpack.c.l.b16 %v116
    %v401 = vunpack.c.l.b16 %v117
    %v402 = vunpack.c.l.b16 %v118
    %v403 = vunpack.c.l.b16 %v119
    %v404 = vunpack.c.l.b16 %v120
    %v405 = vunpack.c.l.b16 %v121
    %v406 = vunpack.c.l.b16 %v122
    %v407 = vunpack.c.l.b16 %v123
    %v408 = vunpack.c.l.b16 %v124
    %v409 = vunpack.c.l.b16 %v125
    %v410 = vunpack.c.l.b16 %v126
    %v411 = vunpack.c.l.b16 %v127
    %v412 = vunpack.c.l.b16 %v128
    %v413 = vunpack.c.l.b16 %v129
    %v414 = vunpack.c.l.b16 %v130
    %v415 = vunpack.c.l.b16 %v131
    %v416 = vunpack.c.l.b16 %v132
    %v417 = vunpack.c.l.b16 %v133
    %v418 = vunpack.c.l.b16 %v134
    %v419 = vunpack.c.l.b16 %v135
    %v420 = vunpack.c.l.b16 %v136
    %v421 = vunpack.c.l.b16 %v137
    %v422 = vunpack.c.l.b16 %v138
    %v423 = vunpack.c.l.b16 %v139
    %v424 = vunpack.c.l.b16 %v140
    %v425 = vunpack.c.l.b16 %v141
    %v426 = vunpack.c.l.b16 %v142
    %v427 = vunpack.c.l.b16 %v143
    %v428 = vunpack.c.l.b16 %v144
    %v429 = vunpack.c.l.b16 %v145
    %v430 = vunpack.c.l.b16 %v146
    %v431 = vunpack.c.l.b16 %v147
    %v432 = vunpack.c.l.b16 %v148
    %v433 = vunpack.c.l.b16 %v149
    %v434 = vunpack.c.l.b16 %v150
    %v435 = vunpack.c.l.b16 %v151
    %v436 = vunpack.c.l.b16 %v152
    %v437 = vunpack.c.l.b16 %v153
    %v438 = vunpack.c.l.b16 %v154
    %v439 = vunpack.c.l.b16 %v155
    %v440 = vunpack.c.l.b16 %v156
    %v441 = vunpack.c.l.b16 %v157
    %v442 = vunpack.c.l.b16 %v158
    %v443 = vunpack.c.l.b16 %v159
    %v444 = vunpack.c.l.b16 %v160
    %v445 = vunpack.c.l.b16 %v161
    %v446 = vunpack.c.l.b16 %v162
    %v447 = vunpack.c.l.b16 %v163
    %v448 = vunpack.c.l.b16 %v164
    %v449 = vunpack.c.l.b16 %v165
    %v450 = vunpack.c.l.b16 %v166
    %v451 = vunpack.c.l.b16 %v167
    %v452 = vpack.c.b16 %v325, %v324
    %v453 = vpack.c.b16 %v327, %v326
    %v454 = vpack.c.b16 %v329, %v328
    %v455 = vpack.c.b16 %v331, %v330
    %v456 = vpack.c.b16 %v333, %v332
    %v457 = vpack.c.b16 %v335, %v334
    %v458 = vpack.c.b16 %v337, %v336
    %v459 = vpack.c.b16 %v339, %v338
    %v460 = vpack.c.b16 %v341, %v340
    %v461 = vpack.c.b16 %v343, %v342
    %v462 = vpack.c.b16 %v345, %v344
    %v463 = vpack.c.b16 %v347, %v346
    %v464 = vpack.c.b16 %v349, %v348
    %v465 = vpack.c.b16 %v351, %v350
    %v466 = vpack.c.b16 %v353, %v352
    %v467 = vpack.c.b16 %v355, %v354
    %v468 = vpack.c.b16 %v357, %v356
    %v469 = vpack.c.b16 %v359, %v358
    %v470 = vpack.c.b16 %v361, %v360
    %v471 = vpack.c.b16 %v363, %v362
    %v472 = vpack.c.b16 %v365, %v364
    %v473 = vpack.c.b16 %v367, %v366
    %v474 = vpack.c.b16 %v369, %v368
    %v475 = vpack.c.b16 %v371, %v370
    %v476 = vpack.c.b16 %v373, %v372
    %v477 = vpack.c.b16 %v375, %v374
    %v478 = vpack.c.b16 %v377, %v376
    %v479 = vpack.c.b16 %v379, %v378
    %v480 = vpack.c.b16 %v381, %v380
    %v481 = vpack.c.b16 %v383, %v382
    %v482 = vpack.c.b16 %v385, %v384
    %v483 = vpack.c.b16 %v387, %v386
    %v484 = vpack.c.b16 %v389, %v388
    %v485 = vpack.c.b16 %v391, %v390
    %v486 = vpack.c.b16 %v393, %v392
    %v487 = vpack.c.b16 %v395, %v394
    %v488 = vpack.c.b16 %v397, %v396
    %v489 = vpack.c.b16 %v399, %v398
    %v490 = vpack.c.b16 %v401, %v400
    %v491 = vpack.c.b16 %v403, %v402
    %v492 = vpack.c.b16 %v405, %v404
    %v493 = vpack.c.b16 %v407, %v406
    %v494 = vpack.c.b16 %v409, %v408
    %v495 = vpack.c.b16 %v411, %v410
    %v496 = vpack.c.b16 %v413, %v412
    %v497 = vpack.c.b16 %v415, %v414
    %v498 = vpack.c.b16 %v417, %v416
    %v499 = vpack.c.b16 %v419, %v418
    %v500 = vpack.c.b16 %v421, %v420
    %v501 = vpack.c.b16 %v423, %v422
    %v502 = vpack.c.b16 %v425, %v424
    %v503 = vpack.c.b16 %v427, %v426
    %v504 = vpack.c.b16 %v429, %v428
    %v505 = vpack.c.b16 %v431, %v430
    %v506 = vpack.c.b16 %v433, %v432
    %v507 = vpack.c.b16 %v435, %v434
    %v508 = vpack.c.b16 %v437, %v436
    %v509 = vpack.c.b16 %v439, %v438
    %v510 = vpack.c.b16 %v441, %v440
    %v511 = vpack.c.b16 %v443, %v442
    %v512 = vpack.c.b16 %v445, %v444
    %v513 = vpack.c.b16 %v447, %v446
    %v514 = vpack.c.b16 %v449, %v448
    %v515 = vpack.c.b16 %v451, %v450
    %580 = vmatprep.subr.bf16.mxu0 0
    %581 = vmatpush1.bf16.msra.mxu0 %v452
    %582 = vmatprep.subr.bf16.mxu0 0
    %583 = vmatpush1.bf16.msra.mxu0 %v453
    %584 = vmatprep.subr.bf16.mxu0 0
    %585 = vmatpush1.bf16.msra.mxu0 %v454
    %586 = vmatprep.subr.bf16.mxu0 0
    %587 = vmatpush1.bf16.msra.mxu0 %v455
    %588 = vmatprep.subr.bf16.mxu0 0
    %589 = vmatpush1.bf16.msra.mxu0 %v456
    %590 = vmatprep.subr.bf16.mxu0 0
    %591 = vmatpush1.bf16.msra.mxu0 %v457
    %592 = vmatprep.subr.bf16.mxu0 0
    %593 = vmatpush1.bf16.msra.mxu0 %v458
    %594 = vmatprep.subr.bf16.mxu0 0
    %595 = vmatpush1.bf16.msra.mxu0 %v459
    %596 = vmatprep.subr.bf16.mxu0 0
    %597 = vmatpush1.bf16.msra.mxu0 %v460
    %598 = vmatprep.subr.bf16.mxu0 0
    %599 = vmatpush1.bf16.msra.mxu0 %v461
    %600 = vmatprep.subr.bf16.mxu0 0
    %601 = vmatpush1.bf16.msra.mxu0 %v462
    %602 = vmatprep.subr.bf16.mxu0 0
    %603 = vmatpush1.bf16.msra.mxu0 %v463
    %604 = vmatprep.subr.bf16.mxu0 0
    %605 = vmatpush1.bf16.msra.mxu0 %v464
    %606 = vmatprep.subr.bf16.mxu0 0
    %607 = vmatpush1.bf16.msra.mxu0 %v465
    %608 = vmatprep.subr.bf16.mxu0 0
    %609 = vmatpush1.bf16.msra.mxu0 %v466
    %610 = vmatprep.subr.bf16.mxu0 0
    %611 = vmatpush1.bf16.msra.mxu0 %v467
    %612 = vmatprep.mubr.bf16.mxu0 %v181
    %613 = vmatmul.mubr.bf16.gmra.mrb[0].mxu0 %v180
    %v614 = vpop.f32.mrb[0].mxu0
    %v615 = vadd.f32 0.0, %v614
    %v616 = vpop.f32.mrb[0].mxu0
    %v617 = vpop.f32.mrb[0].mxu0
    %v618 = vpop.f32.mrb[0].mxu0
    %619 = vdwg.mxu0
    %620 = vmatprep.subr.bf16.mxu0 0
    %621 = vmatpush1.bf16.msra.mxu0 %v468
    %622 = vmatprep.subr.bf16.mxu0 0
    %623 = vmatpush1.bf16.msra.mxu0 %v469
    %624 = vmatprep.subr.bf16.mxu0 0
    %625 = vmatpush1.bf16.msra.mxu0 %v470
    %626 = vmatprep.subr.bf16.mxu0 0
    %627 = vmatpush1.bf16.msra.mxu0 %v471
    %628 = vmatprep.subr.bf16.mxu0 0
    %629 = vmatpush1.bf16.msra.mxu0 %v472
    %630 = vmatprep.subr.bf16.mxu0 0
    %631 = vmatpush1.bf16.msra.mxu0 %v473
    %632 = vmatprep.subr.bf16.mxu0 0
    %633 = vmatpush1.bf16.msra.mxu0 %v474
    %634 = vmatprep.subr.bf16.mxu0 0
    %635 = vmatpush1.bf16.msra.mxu0 %v475
    %636 = vmatprep.subr.bf16.mxu0 0
    %637 = vmatpush1.bf16.msra.mxu0 %v476
    %638 = vmatprep.subr.bf16.mxu0 0
    %639 = vmatpush1.bf16.msra.mxu0 %v477
    %640 = vmatprep.subr.bf16.mxu0 0
    %641 = vmatpush1.bf16.msra.mxu0 %v478
    %642 = vmatprep.subr.bf16.mxu0 0
    %643 = vmatpush1.bf16.msra.mxu0 %v479
    %644 = vmatprep.subr.bf16.mxu0 0
    %645 = vmatpush1.bf16.msra.mxu0 %v480
    %646 = vmatprep.subr.bf16.mxu0 0
    %647 = vmatpush1.bf16.msra.mxu0 %v481
    %648 = vmatprep.subr.bf16.mxu0 0
    %649 = vmatpush1.bf16.msra.mxu0 %v482
    %650 = vmatprep.subr.bf16.mxu0 0
    %651 = vmatpush1.bf16.msra.mxu0 %v483
    %652 = vmatprep.mubr.bf16.mxu0 %v183
    %653 = vmatmul.mubr.bf16.gmra.mrb[0].mxu0 %v182
    %v654 = vpop.f32.mrb[0].mxu0
    %v655 = vadd.f32 %v615, %v654
    %v656 = vpop.f32.mrb[0].mxu0
    %v657 = vpop.f32.mrb[0].mxu0
    %v658 = vpop.f32.mrb[0].mxu0
    %659 = vdwg.mxu0
    %660 = vmatprep.subr.bf16.mxu0 0
    %661 = vmatpush1.bf16.msra.mxu0 %v484
    %662 = vmatprep.subr.bf16.mxu0 0
    %663 = vmatpush1.bf16.msra.mxu0 %v485
    %664 = vmatprep.subr.bf16.mxu0 0
    %665 = vmatpush1.bf16.msra.mxu0 %v486
    %666 = vmatprep.subr.bf16.mxu0 0
    %667 = vmatpush1.bf16.msra.mxu0 %v487
    %668 = vmatprep.subr.bf16.mxu0 0
    %669 = vmatpush1.bf16.msra.mxu0 %v488
    %670 = vmatprep.subr.bf16.mxu0 0
    %671 = vmatpush1.bf16.msra.mxu0 %v489
    %672 = vmatprep.subr.bf16.mxu0 0
    %673 = vmatpush1.bf16.msra.mxu0 %v490
    %674 = vmatprep.subr.bf16.mxu0 0
    %675 = vmatpush1.bf16.msra.mxu0 %v491
    %676 = vmatprep.subr.bf16.mxu0 0
    %677 = vmatpush1.bf16.msra.mxu0 %v492
    %678 = vmatprep.subr.bf16.mxu0 0
    %679 = vmatpush1.bf16.msra.mxu0 %v493
    %680 = vmatprep.subr.bf16.mxu0 0
    %681 = vmatpush1.bf16.msra.mxu0 %v494
    %682 = vmatprep.subr.bf16.mxu0 0
    %683 = vmatpush1.bf16.msra.mxu0 %v495
    %684 = vmatprep.subr.bf16.mxu0 0
    %685 = vmatpush1.bf16.msra.mxu0 %v496
    %686 = vmatprep.subr.bf16.mxu0 0
    %687 = vmatpush1.bf16.msra.mxu0 %v497
    %688 = vmatprep.subr.bf16.mxu0 0
    %689 = vmatpush1.bf16.msra.mxu0 %v498
    %690 = vmatprep.subr.bf16.mxu0 0
    %691 = vmatpush1.bf16.msra.mxu0 %v499
    %692 = vmatprep.mubr.bf16.mxu0 %v185
    %693 = vmatmul.mubr.bf16.gmra.mrb[0].mxu0 %v184
    %v694 = vpop.f32.mrb[0].mxu0
    %v695 = vadd.f32 %v655, %v694
    %v696 = vpop.f32.mrb[0].mxu0
    %v697 = vpop.f32.mrb[0].mxu0
    %v698 = vpop.f32.mrb[0].mxu0
    %699 = vdwg.mxu0
    %700 = vmatprep.subr.bf16.mxu0 0
    %701 = vmatpush1.bf16.msra.mxu0 %v500
    %702 = vmatprep.subr.bf16.mxu0 0
    %703 = vmatpush1.bf16.msra.mxu0 %v501
    %704 = vmatprep.subr.bf16.mxu0 0
    %705 = vmatpush1.bf16.msra.mxu0 %v502
    %706 = vmatprep.subr.bf16.mxu0 0
    %707 = vmatpush1.bf16.msra.mxu0 %v503
    %708 = vmatprep.subr.bf16.mxu0 0
    %709 = vmatpush1.bf16.msra.mxu0 %v504
    %710 = vmatprep.subr.bf16.mxu0 0
    %711 = vmatpush1.bf16.msra.mxu0 %v505
    %712 = vmatprep.subr.bf16.mxu0 0
    %713 = vmatpush1.bf16.msra.mxu0 %v506
    %714 = vmatprep.subr.bf16.mxu0 0
    %715 = vmatpush1.bf16.msra.mxu0 %v507
    %716 = vmatprep.subr.bf16.mxu0 0
    %717 = vmatpush1.bf16.msra.mxu0 %v508
    %718 = vmatprep.subr.bf16.mxu0 0
    %719 = vmatpush1.bf16.msra.mxu0 %v509
    %720 = vmatprep.subr.bf16.mxu0 0
    %721 = vmatpush1.bf16.msra.mxu0 %v510
    %722 = vmatprep.subr.bf16.mxu0 0
    %723 = vmatpush1.bf16.msra.mxu0 %v511
    %724 = vmatprep.subr.bf16.mxu0 0
    %725 = vmatpush1.bf16.msra.mxu0 %v512
    %726 = vmatprep.subr.bf16.mxu0 0
    %727 = vmatpush1.bf16.msra.mxu0 %v513
    %728 = vmatprep.subr.bf16.mxu0 0
    %729 = vmatpush1.bf16.msra.mxu0 %v514
    %730 = vmatprep.subr.bf16.mxu0 0
    %731 = vmatpush1.bf16.msra.mxu0 %v515
    %732 = vmatprep.mubr.bf16.mxu0 %v187
    %733 = vmatmul.mubr.bf16.gmra.mrb[0].mxu0 %v186
    %v734 = vpop.f32.mrb[0].mxu0
    %v735 = vadd.f32 %v695, %v734
    %v736 = vpop.f32.mrb[0].mxu0
    %v737 = vpop.f32.mrb[0].mxu0
    %v738 = vpop.f32.mrb[0].mxu0
    %739 = vdwg.mxu0
    %v740 = vadd.f32 %v35, %v735
    %vm741 = vcmask 261120
    %742 = vst.msk [vmem:[#allocation2] sm:$0xff] %vm741, %v740
    // Predicated region
    $region26: #{tpu_custom_call.1} parent=1 // pred_check
      %p743 = pneg %p22
    $region27: #{tpu_custom_call.1} parent=1 // pred_check_branch
      %745 = sbr.rel (%p743) target = $region29
    $region28: #{tpu_custom_call.1} parent=1 // pred_region
      %v746 = vld [vmem:[#allocation2] sm:$0xff]
      %v747 = vmax.f32 %v746, 0.0
      %v748 = vpack.c.bf16 %v747, %v747
      %v749 = vld [vmem:[%s3] sm:$0xf]
      %v750 = vld [vmem:[%s3 + $0x4] sm:$0xf]
      %v751 = vld [vmem:[%s3 + $0x8] sm:$0xf]
      %v752 = vld [vmem:[%s3 + $0xc] sm:$0xf]
      %v753 = vld [vmem:[%s4] sm:$0x1]
      %v755 = vlaneseq
      %v756 = vshrl.u32 %v755, 7
      %v757 = vsub.s32 0, %v756
      %v758 = vrot.slane %v753, %v757
      %v764 = vunpack.c.l.b16 %v749
      %v765 = vunpack.c.l.b16 %v750
      %v766 = vunpack.c.l.b16 %v751
      %v767 = vunpack.c.l.b16 %v752
      %v768 = vpack.c.b16 %v765, %v764
      %v769 = vpack.c.b16 %v767, %v766
      %v773 = vsel %vm741, %v748, 0
      %775 = vmatprep.subr.bf16.mxu0 0
      %776 = vmatpush1.bf16.msra.mxu0 %v768
      %777 = vmatprep.subr.bf16.mxu0 0
      %778 = vmatpush1.bf16.msra.mxu0 %v769
      %779 = vmatprep.subr.bf16.mxu0 0
      %780 = vmatpush1.bf16.msra.mxu0 0
      %781 = vmatprep.subr.bf16.mxu0 0
      %782 = vmatpush1.bf16.msra.mxu0 0
      %783 = vmatprep.subr.bf16.mxu0 0
      %784 = vmatpush1.bf16.msra.mxu0 0
      %785 = vmatprep.subr.bf16.mxu0 0
      %786 = vmatpush1.bf16.msra.mxu0 0
      %787 = vmatprep.subr.bf16.mxu0 0
      %788 = vmatpush1.bf16.msra.mxu0 0
      %789 = vmatprep.subr.bf16.mxu0 0
      %790 = vmatpush1.bf16.msra.mxu0 0
      %791 = vmatprep.subr.bf16.mxu0 0
      %792 = vmatpush1.bf16.msra.mxu0 0
      %793 = vmatprep.subr.bf16.mxu0 0
      %794 = vmatpush1.bf16.msra.mxu0 0
      %795 = vmatprep.subr.bf16.mxu0 0
      %796 = vmatpush1.bf16.msra.mxu0 0
      %797 = vmatprep.subr.bf16.mxu0 0
      %798 = vmatpush1.bf16.msra.mxu0 0
      %799 = vmatprep.subr.bf16.mxu0 0
      %800 = vmatpush1.bf16.msra.mxu0 0
      %801 = vmatprep.subr.bf16.mxu0 0
      %802 = vmatpush1.bf16.msra.mxu0 0
      %803 = vmatprep.subr.bf16.mxu0 0
      %804 = vmatpush1.bf16.msra.mxu0 0
      %805 = vmatprep.subr.bf16.mxu0 0
      %806 = vmatpush1.bf16.msra.mxu0 0
      %807 = vmatprep.mubr.bf16.mxu0 0
      %808 = vmatmul.mubr.bf16.gmra.mrb[0].mxu0 %v773
      %v809 = vpop.f32.mrb[0].mxu0
      %v810 = vadd.f32 %v758, %v809
      %v811 = vpop.f32.mrb[0].mxu0
      %v812 = vpop.f32.mrb[0].mxu0
      %v813 = vpop.f32.mrb[0].mxu0
      %814 = vdwg.mxu0
      %815 = vst [vmem:[#allocation3] sm:$0xff] %v810
    $region29: #{tpu_custom_call.1} parent=1 // pred_fallthru
      _
    // Predicated region
    $region30: #{tpu_custom_call.1} parent=1 // pred_check
      _
    $region31: #{tpu_custom_call.1} parent=1 // pred_check_branch
      %817 = sbr.rel (0) target = $region33
    $region32: #{tpu_custom_call.1} parent=1 // pred_region
      %s819 = ssub.s32 128, 128
      %820 = vsyncadd [#allocation4], %s819
      %s822 = sshll.u32 [#allocation3], 4
      %s823 = int_to_ptr.vmem [resolvable:$true] %s822
      %825 = dma.vmem_to_hbm [thread:$0]  %s823, 128, %s5, [#allocation4]
    $region33: #{tpu_custom_call.1} parent=1 // pred_fallthru
      _
    // Predicated region
    $region34: #{tpu_custom_call.1} parent=1 // pred_check
      _
    $region35: #{tpu_custom_call.1} parent=1 // pred_check_branch
      %827 = sbr.rel (0) target = $region37
    $region36: #{tpu_custom_call.1} parent=1 // pred_region
      %828 = dma.done [#allocation4], 128
    $region37: #{tpu_custom_call.1} parent=1 // pred_fallthru
      _
    %829 = vsyncpa [#allocation4], 1

</llo_original>
